<compile_context>
chip_gen: v5e
topology: v5e:2x2
jax: 0.10.0
libtpu: 0.0.40
codegen_flags: <defaults>
</compile_context>

<pallas_src>
import functools

import jax
import jax.numpy as jnp
from jax.experimental import pallas as pl
from jax.experimental.pallas import tpu as pltpu

_LANES = 128
_MAX_BATCH_TILE = 512


def _round_up(x, m):
    return ((x + m - 1) // m) * m


def _text_sentiment_kernel(text_ref, a_ref, b1_ref, w2_ref, b2_ref,
                           probs_ref, fc1_ref, *, num_class, inv_s):
    # text_ref : (Bt, S)    int32 token ids
    # a_ref    : (Vp, 128)  f32   pre-folded  embedding @ W1  (cols >= 10 zero)
    # b1_ref   : (1, 128)   f32   fc1 bias    (lanes >= 10 zero)
    # w2_ref   : (128, 128) f32   fc2 weight  (rows >= 10 / cols >= C zero)
    # b2_ref   : (1, 128)   f32   fc2 bias    (lanes >= C zero)
    txt = text_ref[...]
    bt, seq = txt.shape
    vp = a_ref.shape[0]

    # Bag-of-words counts over the (padded) vocab/lane axis.  The embedding
    # bag + mean-pool + fc1 chain is linear, so
    #   mean_s(E[text]) @ W1  ==  (counts / S) @ (E @ W1)
    # which is a single lane-dense MXU matmul (K = Vp, a multiple of 128).
    vocab_iota = jax.lax.broadcasted_iota(jnp.int32, (bt, vp), 1)  # hoisted
    counts = jnp.zeros((bt, vp), jnp.float32)
    for s in range(seq):          # static, short unrolled loop over the tokens
        counts = counts + (vocab_iota == txt[:, s:s + 1]).astype(jnp.float32)

    h1 = jnp.dot(counts * inv_s, a_ref[...],
                 preferred_element_type=jnp.float32) + b1_ref[...]
    fc1_ref[...] = h1             # lanes >= 10 are exactly 0 (padded weights)

    logits = jnp.dot(h1, w2_ref[...],
                     preferred_element_type=jnp.float32) + b2_ref[...]

    # Softmax over the first num_class lanes; padded lanes masked out.
    lane = jax.lax.broadcasted_iota(jnp.int32, logits.shape, 1)
    masked = jnp.where(lane < num_class, logits, -1e30)
    m = jnp.max(masked, axis=1, keepdims=True)
    e = jnp.exp(masked - m)                        # padded lanes underflow to 0
    denom = jnp.sum(e, axis=1, keepdims=True)
    inv = pl.reciprocal(denom, approx=True)        # EUP slot (co-issues freely)
    inv = inv * (2.0 - denom * inv)                # one Newton step -> f32 exact
    probs_ref[...] = e * inv


@functools.partial(jax.jit, static_argnames=("num_class", "hidden"))
def text_sentiment_forward(text, a_fold, b1_pad, w2_pad, b2_pad, *,
                           num_class, hidden):
    """text: int32 [B, S]; a_fold: [Vp, 128]; padded biases/weights as above."""
    B, S = text.shape
    Vp, Hp = a_fold.shape

    # Batch tiling: one tile for small B, otherwise 512-row tiles.  Per-tile
    # VMEM traffic (ids + two 128-lane outputs, double-buffered) is well under
    # the 32 MiB scoped default on every generation, including v7x.
    if B <= _MAX_BATCH_TILE:
        bt, bp = B, B
    else:
        bt = _MAX_BATCH_TILE
        bp = _round_up(B, bt)
    if bp != B:
        pad = jnp.zeros((bp - B, S), text.dtype)   # token 0 is a valid index
        text = jnp.concatenate([text, pad], axis=0)

    kernel = functools.partial(_text_sentiment_kernel,
                               num_class=num_class, inv_s=1.0 / S)

    probs_pad, fc1_pad = pl.pallas_call(
        kernel,
        out_shape=(
            jax.ShapeDtypeStruct((bp, _LANES), jnp.float32),   # probs (padded)
            jax.ShapeDtypeStruct((bp, _LANES), jnp.float32),   # fc1   (padded)
        ),
        grid_spec=pltpu.PrefetchScalarGridSpec(
            num_scalar_prefetch=0,
            grid=(bp // bt,),
            in_specs=[
                pl.BlockSpec((bt, S), lambda i: (i, 0)),    # token ids, tiled
                pl.BlockSpec((Vp, Hp), lambda i: (0, 0)),   # folded table: resident
                pl.BlockSpec((1, Hp), lambda i: (0, 0)),    # b1: resident
                pl.BlockSpec((Hp, Hp), lambda i: (0, 0)),   # w2: resident
                pl.BlockSpec((1, Hp), lambda i: (0, 0)),    # b2: resident
            ],
            out_specs=(
                pl.BlockSpec((bt, _LANES), lambda i: (i, 0)),
                pl.BlockSpec((bt, _LANES), lambda i: (i, 0)),
            ),
        ),
        compiler_params=pltpu.CompilerParams(
            dimension_semantics=("parallel",),   # 2-TC split on v7x, harmless on v5e/v6e
            vmem_limit_bytes=32 * 1024 * 1024,
        ),
    )(text, a_fold, b1_pad, w2_pad, b2_pad)

    return probs_pad[:B, :num_class], fc1_pad[:B, :hidden]


class TextSentimentPallas:
    def __init__(self, vocab_size, embed_dim=32, num_class=2, seed=0):
        initrange = 0.5
        hidden = 10
        k_emb, k_w1, k_w2 = jax.random.split(jax.random.PRNGKey(seed), 3)
        # Matches the PyTorch init: uniform(-0.5, 0.5) weights, zero biases.
        self.embedding = jax.random.uniform(
            k_emb, (vocab_size, embed_dim), jnp.float32, -initrange, initrange)
        # fc1.weight: (10, embed_dim) -> stored transposed (embed_dim, 10)
        self.w1 = jax.random.uniform(
            k_w1, (hidden, embed_dim), jnp.float32, -initrange, initrange).T
        self.b1 = jnp.zeros((1, hidden), jnp.float32)
        # fc2.weight: (num_class, 10) -> stored transposed (10, num_class)
        self.w2 = jax.random.uniform(
            k_w2, (num_class, hidden), jnp.float32, -initrange, initrange).T
        self.b2 = jnp.zeros((1, num_class), jnp.float32)
        self.num_class = num_class
        self.hidden = hidden

        # --- kernel-side folded / lane-padded parameters (one-time) ---------
        # A = embedding @ W1 : (vocab, 10).  Folding fc1's weight into the
        # table turns EmbeddingBag(mean) + fc1 into one small MXU matmul
        # against bag-of-words counts, keeping the gather off HBM entirely.
        vp = _round_up(max(vocab_size, _LANES), _LANES)
        hp = _LANES
        a = jnp.dot(self.embedding, self.w1,
                    precision=jax.lax.Precision.HIGHEST)
        self.a_fold = jnp.zeros((vp, hp), jnp.float32).at[
            :vocab_size, :hidden].set(a)
        self.b1_pad = jnp.zeros((1, hp), jnp.float32).at[:, :hidden].set(self.b1)
        self.w2_pad = jnp.zeros((hp, hp), jnp.float32).at[
            :hidden, :num_class].set(self.w2)
        self.b2_pad = jnp.zeros((1, hp), jnp.float32).at[
            :, :num_class].set(self.b2)

    def __call__(self, text):
        # text: int32 [B, S].  EmbeddingBag(text, None): each row is a bag,
        # mode 'mean'.  Everything (lookup, pooling, fc1, fc2, softmax) runs
        # inside the Pallas kernel.
        probs, fc1 = text_sentiment_forward(
            text, self.a_fold, self.b1_pad, self.w2_pad, self.b2_pad,
            num_class=self.num_class, hidden=self.hidden)
        self.result = [fc1]
        return probs

    def get_fc_result(self):
        return self.result


if __name__ == "__main__":
    vocab_size, embed_dim, num_class = 100, 32, 2

    model = TextSentimentPallas(vocab_size, embed_dim, num_class, seed=0)

    def reference(text):
        emb = model.embedding[text]                        # (B, S, D)
        pooled = jnp.mean(emb, axis=1)
        h1 = jnp.dot(pooled, model.w1,
                     precision=jax.lax.Precision.HIGHEST) + model.b1
        logits = jnp.dot(h1, model.w2,
                         precision=jax.lax.Precision.HIGHEST) + model.b2
        return jax.nn.softmax(logits, axis=1), h1

    # Small smoke test (single batch tile).
    batch, seq = 2, 8
    text = jax.random.randint(jax.random.PRNGKey(0), (batch, seq), 0,
                              vocab_size, dtype=jnp.int32)
    probs = model(text)
    jax.block_until_ready(probs)
    fc1 = model.get_fc_result()[0]
    ref_probs, ref_fc1 = reference(text)
    assert probs.shape == (batch, num_class)
    assert fc1.shape == (batch, 10)
    assert jnp.allclose(probs, ref_probs, atol=1e-4, rtol=1e-4), (probs, ref_probs)
    assert jnp.allclose(fc1, ref_fc1, atol=1e-4, rtol=1e-4), (fc1, ref_fc1)

    # Larger batch: exercises the batch grid (512-row tiles) + padding path.
    batch2 = 600
    text2 = jax.random.randint(jax.random.PRNGKey(1), (batch2, seq), 0,
                               vocab_size, dtype=jnp.int32)
    probs2 = model(text2)
    jax.block_until_ready(probs2)
    ref_probs2, _ = reference(text2)
    assert probs2.shape == (batch2, num_class)
    assert jnp.allclose(probs2, ref_probs2, atol=1e-4, rtol=1e-4)

    print("KERNEL_OK")
</pallas_src>

<mosaic_0001>
module attributes {stable_mosaic.version = 11 : i64} {
  func.func @_text_sentiment_kernel(%arg0: i32, %arg1: memref<2x8xi32, #tpu.memory_space<vmem>>, %arg2: memref<128x128xf32, #tpu.memory_space<vmem>>, %arg3: memref<1x128xf32, #tpu.memory_space<vmem>>, %arg4: memref<128x128xf32, #tpu.memory_space<vmem>>, %arg5: memref<1x128xf32, #tpu.memory_space<vmem>>, %arg6: memref<2x128xf32, #tpu.memory_space<vmem>>, %arg7: memref<2x128xf32, #tpu.memory_space<vmem>>) attributes {dimension_semantics = [#tpu.dimension_semantics<parallel>], iteration_bounds = array<i64: 1>, scalar_prefetch = 0 : i64, scratch_operands = 0 : i64, tpu.core_type = #tpu.core_type<tc>, window_params = [{transform_indices = @transform_0, window_bounds = array<i64: 2, 8>}, {pipeline_mode = #tpu.pipeline_mode<synchronous>, transform_indices = @transform_1, window_bounds = array<i64: 128, 128>}, {pipeline_mode = #tpu.pipeline_mode<synchronous>, transform_indices = @transform_2, window_bounds = array<i64: 1, 128>}, {pipeline_mode = #tpu.pipeline_mode<synchronous>, transform_indices = @transform_3, window_bounds = array<i64: 128, 128>}, {pipeline_mode = #tpu.pipeline_mode<synchronous>, transform_indices = @transform_4, window_bounds = array<i64: 1, 128>}, {transform_indices = @transform_5, window_bounds = array<i64: 2, 128>}, {transform_indices = @transform_6, window_bounds = array<i64: 2, 128>}]} {
    %c0 = arith.constant 0 : index
    %c0_0 = arith.constant 0 : index
    %0 = vector.load %arg1[%c0, %c0_0] : memref<2x8xi32, #tpu.memory_space<vmem>>, vector<2x8xi32>
    %1 = tpu.iota {dimensions = array<i32: 1>} : vector<2x128xi32>
    %cst = arith.constant 0.000000e+00 : f32
    %2 = vector.broadcast %cst : f32 to vector<2x128xf32>
    %3 = vector.extract_strided_slice %0 {offsets = [0, 0], sizes = [2, 1], strides = [1, 1]} : vector<2x8xi32> to vector<2x1xi32>
    %4 = vector.broadcast %3 : vector<2x1xi32> to vector<2x128xi32>
    %5 = arith.cmpi eq, %1, %4 : vector<2x128xi32>
    %6 = arith.extui %5 : vector<2x128xi1> to vector<2x128xi32>
    %7 = arith.sitofp %6 : vector<2x128xi32> to vector<2x128xf32>
    %8 = arith.addf %2, %7 : vector<2x128xf32>
    %9 = vector.extract_strided_slice %0 {offsets = [0, 1], sizes = [2, 1], strides = [1, 1]} : vector<2x8xi32> to vector<2x1xi32>
    %10 = vector.broadcast %9 : vector<2x1xi32> to vector<2x128xi32>
    %11 = arith.cmpi eq, %1, %10 : vector<2x128xi32>
    %12 = arith.extui %11 : vector<2x128xi1> to vector<2x128xi32>
    %13 = arith.sitofp %12 : vector<2x128xi32> to vector<2x128xf32>
    %14 = arith.addf %8, %13 : vector<2x128xf32>
    %15 = vector.extract_strided_slice %0 {offsets = [0, 2], sizes = [2, 1], strides = [1, 1]} : vector<2x8xi32> to vector<2x1xi32>
    %16 = vector.broadcast %15 : vector<2x1xi32> to vector<2x128xi32>
    %17 = arith.cmpi eq, %1, %16 : vector<2x128xi32>
    %18 = arith.extui %17 : vector<2x128xi1> to vector<2x128xi32>
    %19 = arith.sitofp %18 : vector<2x128xi32> to vector<2x128xf32>
    %20 = arith.addf %14, %19 : vector<2x128xf32>
    %21 = vector.extract_strided_slice %0 {offsets = [0, 3], sizes = [2, 1], strides = [1, 1]} : vector<2x8xi32> to vector<2x1xi32>
    %22 = vector.broadcast %21 : vector<2x1xi32> to vector<2x128xi32>
    %23 = arith.cmpi eq, %1, %22 : vector<2x128xi32>
    %24 = arith.extui %23 : vector<2x128xi1> to vector<2x128xi32>
    %25 = arith.sitofp %24 : vector<2x128xi32> to vector<2x128xf32>
    %26 = arith.addf %20, %25 : vector<2x128xf32>
    %27 = vector.extract_strided_slice %0 {offsets = [0, 4], sizes = [2, 1], strides = [1, 1]} : vector<2x8xi32> to vector<2x1xi32>
    %28 = vector.broadcast %27 : vector<2x1xi32> to vector<2x128xi32>
    %29 = arith.cmpi eq, %1, %28 : vector<2x128xi32>
    %30 = arith.extui %29 : vector<2x128xi1> to vector<2x128xi32>
    %31 = arith.sitofp %30 : vector<2x128xi32> to vector<2x128xf32>
    %32 = arith.addf %26, %31 : vector<2x128xf32>
    %33 = vector.extract_strided_slice %0 {offsets = [0, 5], sizes = [2, 1], strides = [1, 1]} : vector<2x8xi32> to vector<2x1xi32>
    %34 = vector.broadcast %33 : vector<2x1xi32> to vector<2x128xi32>
    %35 = arith.cmpi eq, %1, %34 : vector<2x128xi32>
    %36 = arith.extui %35 : vector<2x128xi1> to vector<2x128xi32>
    %37 = arith.sitofp %36 : vector<2x128xi32> to vector<2x128xf32>
    %38 = arith.addf %32, %37 : vector<2x128xf32>
    %39 = vector.extract_strided_slice %0 {offsets = [0, 6], sizes = [2, 1], strides = [1, 1]} : vector<2x8xi32> to vector<2x1xi32>
    %40 = vector.broadcast %39 : vector<2x1xi32> to vector<2x128xi32>
    %41 = arith.cmpi eq, %1, %40 : vector<2x128xi32>
    %42 = arith.extui %41 : vector<2x128xi1> to vector<2x128xi32>
    %43 = arith.sitofp %42 : vector<2x128xi32> to vector<2x128xf32>
    %44 = arith.addf %38, %43 : vector<2x128xf32>
    %45 = vector.extract_strided_slice %0 {offsets = [0, 7], sizes = [2, 1], strides = [1, 1]} : vector<2x8xi32> to vector<2x1xi32>
    %46 = vector.broadcast %45 : vector<2x1xi32> to vector<2x128xi32>
    %47 = arith.cmpi eq, %1, %46 : vector<2x128xi32>
    %48 = arith.extui %47 : vector<2x128xi1> to vector<2x128xi32>
    %49 = arith.sitofp %48 : vector<2x128xi32> to vector<2x128xf32>
    %50 = arith.addf %44, %49 : vector<2x128xf32>
    %cst_1 = arith.constant 1.250000e-01 : f32
    %51 = vector.broadcast %cst_1 : f32 to vector<2x128xf32>
    %52 = arith.mulf %50, %51 : vector<2x128xf32>
    %c0_2 = arith.constant 0 : index
    %c0_3 = arith.constant 0 : index
    %53 = vector.load %arg2[%c0_2, %c0_3] : memref<128x128xf32, #tpu.memory_space<vmem>>, vector<128x128xf32>
    %cst_4 = arith.constant dense<0.000000e+00> : vector<2x128xf32>
    %54 = tpu.matmul %52, %53, %cst_4 {dimension_numbers = #tpu.dot_dimension_numbers<[1], [0], [0], [1], [0, 0, 1, 1], [], []>} : vector<2x128xf32>, vector<128x128xf32>, vector<2x128xf32> -> vector<2x128xf32>
    %c0_5 = arith.constant 0 : index
    %c0_6 = arith.constant 0 : index
    %55 = vector.load %arg3[%c0_5, %c0_6] : memref<1x128xf32, #tpu.memory_space<vmem>>, vector<1x128xf32>
    %56 = vector.broadcast %55 : vector<1x128xf32> to vector<2x128xf32>
    %57 = arith.addf %54, %56 : vector<2x128xf32>
    %c0_7 = arith.constant 0 : index
    %c0_8 = arith.constant 0 : index
    %58 = vector.load %arg7[%c0_7, %c0_8] : memref<2x128xf32, #tpu.memory_space<vmem>>, vector<2x128xf32>
    tpu.vector_store %arg7[%c0_7, %c0_8], %57 {strides = array<i32>} : memref<2x128xf32, #tpu.memory_space<vmem>>, vector<2x128xf32>,
    %c0_9 = arith.constant 0 : index
    %c0_10 = arith.constant 0 : index
    %59 = vector.load %arg4[%c0_9, %c0_10] : memref<128x128xf32, #tpu.memory_space<vmem>>, vector<128x128xf32>
    %cst_11 = arith.constant dense<0.000000e+00> : vector<2x128xf32>
    %60 = tpu.matmul %57, %59, %cst_11 {dimension_numbers = #tpu.dot_dimension_numbers<[1], [0], [0], [1], [0, 0, 1, 1], [], []>} : vector<2x128xf32>, vector<128x128xf32>, vector<2x128xf32> -> vector<2x128xf32>
    %c0_12 = arith.constant 0 : index
    %c0_13 = arith.constant 0 : index
    %61 = vector.load %arg5[%c0_12, %c0_13] : memref<1x128xf32, #tpu.memory_space<vmem>>, vector<1x128xf32>
    %62 = vector.broadcast %61 : vector<1x128xf32> to vector<2x128xf32>
    %63 = arith.addf %60, %62 : vector<2x128xf32>
    %64 = tpu.iota {dimensions = array<i32: 1>} : vector<2x128xi32>
    %c2_i32 = arith.constant 2 : i32
    %65 = vector.broadcast %c2_i32 : i32 to vector<2x128xi32>
    %66 = arith.cmpi slt, %64, %65 : vector<2x128xi32>
    %cst_14 = arith.constant -1.000000e+30 : f32
    %67 = vector.broadcast %cst_14 : f32 to vector<2x128xf32>
    %68 = arith.select %66, %63, %67 : vector<2x128xi1>, vector<2x128xf32>
    %cst_15 = arith.constant dense<0xFF800000> : vector<2xf32>
    %69 = vector.multi_reduction <maximumf>, %68, %cst_15 [1] : vector<2x128xf32> to vector<2xf32>
    %70 = vector.shape_cast %69 : vector<2xf32> to vector<2x1xf32>
    %71 = vector.broadcast %70 : vector<2x1xf32> to vector<2x128xf32>
    %72 = arith.subf %68, %71 : vector<2x128xf32>
    %73 = math.exp %72 : vector<2x128xf32>
    %cst_16 = arith.constant dense<0.000000e+00> : vector<2xf32>
    %74 = vector.multi_reduction <add>, %73, %cst_16 [1] : vector<2x128xf32> to vector<2xf32>
    %75 = vector.shape_cast %74 : vector<2xf32> to vector<2x1xf32>
    %76 = tpu.reciprocal %75 {approx = true} : vector<2x1xf32> -> vector<2x1xf32>
    %77 = arith.mulf %75, %76 : vector<2x1xf32>
    %cst_17 = arith.constant 2.000000e+00 : f32
    %78 = vector.broadcast %cst_17 : f32 to vector<2x1xf32>
    %79 = arith.subf %78, %77 : vector<2x1xf32>
    %80 = arith.mulf %76, %79 : vector<2x1xf32>
    %81 = vector.broadcast %80 : vector<2x1xf32> to vector<2x128xf32>
    %82 = arith.mulf %73, %81 : vector<2x128xf32>
    %c0_18 = arith.constant 0 : index
    %c0_19 = arith.constant 0 : index
    %83 = vector.load %arg6[%c0_18, %c0_19] : memref<2x128xf32, #tpu.memory_space<vmem>>, vector<2x128xf32>
    tpu.vector_store %arg6[%c0_18, %c0_19], %82 {strides = array<i32>} : memref<2x128xf32, #tpu.memory_space<vmem>>, vector<2x128xf32>,
    return
  }
  func.func @transform_0(%arg0: i32) -> (i32, i32) {
    %c0_i32 = arith.constant 0 : i32
    %c0_i32_0 = arith.constant 0 : i32
    return %arg0, %c0_i32 : i32, i32
  }
  func.func @transform_1(%arg0: i32) -> (i32, i32) {
    %c0_i32 = arith.constant 0 : i32
    %c0_i32_0 = arith.constant 0 : i32
    %c0_i32_1 = arith.constant 0 : i32
    return %c0_i32, %c0_i32_0 : i32, i32
  }
  func.func @transform_2(%arg0: i32) -> (i32, i32) {
    %c0_i32 = arith.constant 0 : i32
    %c0_i32_0 = arith.constant 0 : i32
    %c0_i32_1 = arith.constant 0 : i32
    return %c0_i32, %c0_i32_0 : i32, i32
  }
  func.func @transform_3(%arg0: i32) -> (i32, i32) {
    %c0_i32 = arith.constant 0 : i32
    %c0_i32_0 = arith.constant 0 : i32
    %c0_i32_1 = arith.constant 0 : i32
    return %c0_i32, %c0_i32_0 : i32, i32
  }
  func.func @transform_4(%arg0: i32) -> (i32, i32) {
    %c0_i32 = arith.constant 0 : i32
    %c0_i32_0 = arith.constant 0 : i32
    %c0_i32_1 = arith.constant 0 : i32
    return %c0_i32, %c0_i32_0 : i32, i32
  }
  func.func @transform_5(%arg0: i32) -> (i32, i32) {
    %c0_i32 = arith.constant 0 : i32
    %c0_i32_0 = arith.constant 0 : i32
    return %arg0, %c0_i32 : i32, i32
  }
  func.func @transform_6(%arg0: i32) -> (i32, i32) {
    %c0_i32 = arith.constant 0 : i32
    %c0_i32_0 = arith.constant 0 : i32
    return %arg0, %c0_i32 : i32, i32
  }
}

</mosaic_0001>

<llo_original>
// kernel: text_sentiment_forward.1
$region0: #{text_sentiment_forward.1}
  #allocation0 [shape = 'u32[]', space=smem, size = 0x4, offset = 0x4, fixed_abs, tag = 'smem constant byte address 0x4 - core index']
  #allocation1 [shape = 'u32[72,128]{1,0:T(1,128)}', space=vmem, size = 0x9000, scoped, tag = 'internal scratch']
  %s0 = inlined_call_operand.hbm [shape: s32[2,8], index: 0, kind: input, shape index: {}]
  %s1 = inlined_call_operand.hbm [shape: f32[128,128], index: 1, kind: input, shape index: {}]
  %s2 = inlined_call_operand.vmem [shape: f32[1,128], index: 2, kind: input, shape index: {}]
  %s3 = inlined_call_operand.hbm [shape: f32[128,128], index: 3, kind: input, shape index: {}]
  %s4 = inlined_call_operand.vmem [shape: f32[1,128], index: 4, kind: input, shape index: {}]
  %s5 = inlined_call_operand.hbm [shape: f32[2,128], index: 5, kind: output, shape index: {0}]
  %s6 = inlined_call_operand.hbm [shape: f32[2,128], index: 6, kind: output, shape index: {1}]
  %7 = xla_tuple %s5, %s6
  %s8 = sld [smem:[#allocation0]]
  $region50: #{text_sentiment_forward.1} parent=0
    _
  %s10 = ssub.s32 1, %s8
  %s11 = scalar_select 0, %s10, %s8
  $region1: #{text_sentiment_forward.1} parent=0
    #allocation2 [shape = 'u8[1024]{0}', space=vmem, size = 0x400, scoped, tag = 'input window, operand 0, single buffered']
    #allocation3 [shape = 's32[1]{0}', space=sflag, size = 0x4, scoped, tag = 'scoped memory for text_sentiment_forward.1']
    #allocation4 [shape = 's32[1]{0}', space=sflag, size = 0x4, scoped, tag = 'scoped memory for text_sentiment_forward.1']
    #allocation5 [shape = 'u8[65536]{0}', space=vmem, size = 0x10000, scoped, tag = 'input window, operand 1, single buffered']
    #allocation6 [shape = 's32[1]{0}', space=sflag, size = 0x4, scoped, tag = 'scoped memory for text_sentiment_forward.1']
    #allocation7 [shape = 'u8[65536]{0}', space=vmem, size = 0x10000, scoped, tag = 'input window, operand 3, single buffered']
    #allocation8 [shape = 'u8[1024]{0}', space=vmem, size = 0x400, scoped, tag = 'output window, operand 0, single buffered']
    #allocation9 [shape = 'u8[1024]{0}', space=vmem, size = 0x400, scoped, tag = 'output window, operand 1, single buffered']
    #allocation10 [shape = 's32[1]{0}', space=sflag, size = 0x4, scoped, tag = 'scoped memory for text_sentiment_forward.1']
    %12 = vsyncpa [#allocation3], 0
    %13 = vsyncpa [#allocation6], 0
    %14 = vsyncpa [#allocation4], 0
    %15 = vsyncpa [#allocation10], 0
    // Predicated region
    $region2: #{text_sentiment_forward.1} parent=1 // pred_check
      _
    $region3: #{text_sentiment_forward.1} parent=1 // pred_check_branch
      %17 = sbr.rel (0) target = $region5
    $region4: #{text_sentiment_forward.1} parent=1 // pred_region
      %19 = vsyncadd [#allocation3], 0
      %s21 = sshll.u32 %s0, 4
      %s22 = int_to_ptr.hbm [resolvable:$true] %s21
      %s23 = sshll.u32 [#allocation2], 4
      %s24 = int_to_ptr.vmem [resolvable:$true] %s23
      %26 = dma.hbm_to_vmem [thread:$0]  %s22, 32, %s24, [#allocation3]
    $region5: #{text_sentiment_forward.1} parent=1 // pred_fallthru
      _
    // Predicated region
    $region6: #{text_sentiment_forward.1} parent=1 // pred_check
      _
    $region7: #{text_sentiment_forward.1} parent=1 // pred_check_branch
      %28 = sbr.rel (0) target = $region9
    $region8: #{text_sentiment_forward.1} parent=1 // pred_region
      %30 = vsyncadd [#allocation6], 0
      %s31 = sshll.u32 %s1, 4
      %s32 = int_to_ptr.hbm [resolvable:$true] %s31
      %s33 = sshll.u32 [#allocation5], 4
      %s34 = int_to_ptr.vmem [resolvable:$true] %s33
      %39 = dma.hbm_to_vmem [thread:$0]  %s32, 2048, %s34, [#allocation6], 128, 128, 8
    $region9: #{text_sentiment_forward.1} parent=1 // pred_fallthru
      _
    // Predicated region
    $region10: #{text_sentiment_forward.1} parent=1 // pred_check
      _
    $region11: #{text_sentiment_forward.1} parent=1 // pred_check_branch
      %41 = sbr.rel (0) target = $region13
    $region12: #{text_sentiment_forward.1} parent=1 // pred_region
      _
    $region13: #{text_sentiment_forward.1} parent=1 // pred_fallthru
      _
    // Predicated region
    $region14: #{text_sentiment_forward.1} parent=1 // pred_check
      _
    $region15: #{text_sentiment_forward.1} parent=1 // pred_check_branch
      %43 = sbr.rel (0) target = $region17
    $region16: #{text_sentiment_forward.1} parent=1 // pred_region
      %45 = vsyncadd [#allocation6], 0
      %s46 = sshll.u32 %s3, 4
      %s47 = int_to_ptr.hbm [resolvable:$true] %s46
      %s48 = sshll.u32 [#allocation7], 4
      %s49 = int_to_ptr.vmem [resolvable:$true] %s48
      %54 = dma.hbm_to_vmem [thread:$0]  %s47, 2048, %s49, [#allocation6], 128, 128, 8
    $region17: #{text_sentiment_forward.1} parent=1 // pred_fallthru
      _
    // Predicated region
    $region18: #{text_sentiment_forward.1} parent=1 // pred_check
      _
    $region19: #{text_sentiment_forward.1} parent=1 // pred_check_branch
      %56 = sbr.rel (0) target = $region21
    $region20: #{text_sentiment_forward.1} parent=1 // pred_region
      _
    $region21: #{text_sentiment_forward.1} parent=1 // pred_fallthru
      _
    // Predicated region
    $region22: #{text_sentiment_forward.1} parent=1 // pred_check
      _
    $region23: #{text_sentiment_forward.1} parent=1 // pred_check_branch
      %58 = sbr.rel (0) target = $region25
    $region24: #{text_sentiment_forward.1} parent=1 // pred_region
      %60 = dma.done [#allocation3], 32
    $region25: #{text_sentiment_forward.1} parent=1 // pred_fallthru
      _
    // Predicated region
    $region26: #{text_sentiment_forward.1} parent=1 // pred_check
      _
    $region27: #{text_sentiment_forward.1} parent=1 // pred_check_branch
      %62 = sbr.rel (0) target = $region29
    $region28: #{text_sentiment_forward.1} parent=1 // pred_region
      %64 = dma.done [#allocation6], 2048
    $region29: #{text_sentiment_forward.1} parent=1 // pred_fallthru
      _
    // Predicated region
    $region30: #{text_sentiment_forward.1} parent=1 // pred_check
      _
    $region31: #{text_sentiment_forward.1} parent=1 // pred_check_branch
      %66 = sbr.rel (0) target = $region33
    $region32: #{text_sentiment_forward.1} parent=1 // pred_region
      %68 = dma.done [#allocation6], 2048
    $region33: #{text_sentiment_forward.1} parent=1 // pred_fallthru
      _
    %v69 = vld [vmem:[#allocation2] sm:$0x3]
    %v70 = vlaneseq
    %v71 = vand.u32 %v70, 127
    %72 = vset.pattern.permute.xlu0 0
    %73 = vperm.xlu0 %72, %v69
    %v74 = vpop.permute.xlu0 %73
    %vm75 = vcmp.eq.s32.totalorder %v71, %v74
    %v76 = vsel %vm75, 1, 0
    %v77 = vcvt.s32.f32 %v76
    %v78 = vadd.f32 %v77, 0.0
    %79 = vset.pattern.permute.xlu0 1
    %80 = vperm.xlu0 %79, %v69
    %v81 = vpop.permute.xlu0 %80
    %vm82 = vcmp.eq.s32.totalorder %v71, %v81
    %v83 = vsel %vm82, 1, 0
    %v84 = vcvt.s32.f32 %v83
    %v85 = vadd.f32 %v78, %v84
    %86 = vset.pattern.permute.xlu0 2
    %87 = vperm.xlu0 %86, %v69
    %v88 = vpop.permute.xlu0 %87
    %vm89 = vcmp.eq.s32.totalorder %v71, %v88
    %v90 = vsel %vm89, 1, 0
    %v91 = vcvt.s32.f32 %v90
    %v92 = vadd.f32 %v85, %v91
    %93 = vset.pattern.permute.xlu0 3
    %94 = vperm.xlu0 %93, %v69
    %v95 = vpop.permute.xlu0 %94
    %vm96 = vcmp.eq.s32.totalorder %v71, %v95
    %v97 = vsel %vm96, 1, 0
    %v98 = vcvt.s32.f32 %v97
    %v99 = vadd.f32 %v92, %v98
    %100 = vset.pattern.permute.xlu0 4
    %101 = vperm.xlu0 %100, %v69
    %v102 = vpop.permute.xlu0 %101
    %vm103 = vcmp.eq.s32.totalorder %v71, %v102
    %v104 = vsel %vm103, 1, 0
    %v105 = vcvt.s32.f32 %v104
    %v106 = vadd.f32 %v99, %v105
    %107 = vset.pattern.permute.xlu0 5
    %108 = vperm.xlu0 %107, %v69
    %v109 = vpop.permute.xlu0 %108
    %vm110 = vcmp.eq.s32.totalorder %v71, %v109
    %v111 = vsel %vm110, 1, 0
    %v112 = vcvt.s32.f32 %v111
    %v113 = vadd.f32 %v106, %v112
    %114 = vset.pattern.permute.xlu0 6
    %115 = vperm.xlu0 %114, %v69
    %v116 = vpop.permute.xlu0 %115
    %vm117 = vcmp.eq.s32.totalorder %v71, %v116
    %v118 = vsel %vm117, 1, 0
    %v119 = vcvt.s32.f32 %v118
    %v120 = vadd.f32 %v113, %v119
    %121 = vset.pattern.permute.xlu0 7
    %122 = vperm.xlu0 %121, %v69
    %v123 = vpop.permute.xlu0 %122
    %vm124 = vcmp.eq.s32.totalorder %v71, %v123
    %v125 = vsel %vm124, 1, 0
    %v126 = vcvt.s32.f32 %v125
    %v127 = vadd.f32 %v120, %v126
    %v128 = vmul.f32 %v127, 0.125
    %v129 = vld [vmem:[#allocation5] sm:$0xff]
    %v130 = vld [vmem:[#allocation5 + $0x8] sm:$0xff]
    %v131 = vld [vmem:[#allocation5 + $0x10] sm:$0xff]
    %v132 = vld [vmem:[#allocation5 + $0x18] sm:$0xff]
    %v133 = vld [vmem:[#allocation5 + $0x20] sm:$0xff]
    %v134 = vld [vmem:[#allocation5 + $0x28] sm:$0xff]
    %v135 = vld [vmem:[#allocation5 + $0x30] sm:$0xff]
    %v136 = vld [vmem:[#allocation5 + $0x38] sm:$0xff]
    %v137 = vld [vmem:[#allocation5 + $0x40] sm:$0xff]
    %v138 = vld [vmem:[#allocation5 + $0x48] sm:$0xff]
    %v139 = vld [vmem:[#allocation5 + $0x50] sm:$0xff]
    %v140 = vld [vmem:[#allocation5 + $0x58] sm:$0xff]
    %v141 = vld [vmem:[#allocation5 + $0x60] sm:$0xff]
    %v142 = vld [vmem:[#allocation5 + $0x68] sm:$0xff]
    %v143 = vld [vmem:[#allocation5 + $0x70] sm:$0xff]
    %v144 = vld [vmem:[#allocation5 + $0x78] sm:$0xff]
    %v145 = vld [vmem:[%s2] sm:$0x1]
    %v147 = vperm.slane %v145, 0
    %149 = vmatpush.msra.mxu0 %v144
    %150 = vmatpush.msra.mxu0 %v143
    %151 = vmatpush.msra.mxu0 %v142
    %152 = vmatpush.msra.mxu0 %v141
    %153 = vmatpush.msra.mxu0 %v140
    %154 = vmatpush.msra.mxu0 %v139
    %155 = vmatpush.msra.mxu0 %v138
    %156 = vmatpush.msra.mxu0 %v137
    %157 = vmatpush.msra.mxu0 %v136
    %158 = vmatpush.msra.mxu0 %v135
    %159 = vmatpush.msra.mxu0 %v134
    %160 = vmatpush.msra.mxu0 %v133
    %161 = vmatpush.msra.mxu0 %v132
    %162 = vmatpush.msra.mxu0 %v131
    %163 = vmatpush.msra.mxu0 %v130
    %164 = vmatpush.msra.mxu0 %v129
    %165 = vmatmul.f32.gmra.mxu0 %v128
    %v166 = vpop.f32.mrf.mxu0
    %v167 = vadd.f32 %v147, %v166
    %168 = vdwg.mxu0
    %169 = vst [vmem:[#allocation9] sm:$0x3] %v167
    %v170 = vld [vmem:[#allocation7] sm:$0xff]
    %v171 = vld [vmem:[#allocation7 + $0x8] sm:$0xff]
    %v172 = vld [vmem:[#allocation7 + $0x10] sm:$0xff]
    %v173 = vld [vmem:[#allocation7 + $0x18] sm:$0xff]
    %v174 = vld [vmem:[#allocation7 + $0x20] sm:$0xff]
    %v175 = vld [vmem:[#allocation7 + $0x28] sm:$0xff]
    %v176 = vld [vmem:[#allocation7 + $0x30] sm:$0xff]
    %v177 = vld [vmem:[#allocation7 + $0x38] sm:$0xff]
    %v178 = vld [vmem:[#allocation7 + $0x40] sm:$0xff]
    %v179 = vld [vmem:[#allocation7 + $0x48] sm:$0xff]
    %v180 = vld [vmem:[#allocation7 + $0x50] sm:$0xff]
    %v181 = vld [vmem:[#allocation7 + $0x58] sm:$0xff]
    %v182 = vld [vmem:[#allocation7 + $0x60] sm:$0xff]
    %v183 = vld [vmem:[#allocation7 + $0x68] sm:$0xff]
    %v184 = vld [vmem:[#allocation7 + $0x70] sm:$0xff]
    %v185 = vld [vmem:[#allocation7 + $0x78] sm:$0xff]
    %v186 = vld [vmem:[%s4] sm:$0x1]
    %v188 = vperm.slane %v186, 0
    %190 = vmatpush.msra.mxu0 %v185
    %191 = vmatpush.msra.mxu0 %v184
    %192 = vmatpush.msra.mxu0 %v183
    %193 = vmatpush.msra.mxu0 %v182
    %194 = vmatpush.msra.mxu0 %v181
    %195 = vmatpush.msra.mxu0 %v180
    %196 = vmatpush.msra.mxu0 %v179
    %197 = vmatpush.msra.mxu0 %v178
    %198 = vmatpush.msra.mxu0 %v177
    %199 = vmatpush.msra.mxu0 %v176
    %200 = vmatpush.msra.mxu0 %v175
    %201 = vmatpush.msra.mxu0 %v174
    %202 = vmatpush.msra.mxu0 %v173
    %203 = vmatpush.msra.mxu0 %v172
    %204 = vmatpush.msra.mxu0 %v171
    %205 = vmatpush.msra.mxu0 %v170
    %206 = vmatmul.f32.gmra.mxu0 %v167
    %v207 = vpop.f32.mrf.mxu0
    %v208 = vadd.f32 %v188, %v207
    %209 = vdwg.mxu0
    %vm210 = vcmp.lt.s32.totalorder %v71, 2
    %v211 = vsel %vm210, %v208, -1e+30
    %vm212 = vcmask 1041408
    %v213 = vsel %vm212, %v211, -inf
    %214 = vmax.xlane.f32.xlu0 %v213
    %v215 = vpop.xlane.xlu0 %214
    %v216 = vsub.f32 %v211, %v215
    %v217 = vmul.f32 %v216, 1.442695
    %v218 = vpow.pop %v217
    %v219 = vsel %vm212, %v218, 0.0
    %220 = vadd.xlane.f32.xlu0 %v219
    %v221 = vpop.xlane.xlu0 %220
    %v222 = vrcp.pop %v221
    %v223 = vmul.f32 %v221, %v222
    %v224 = vsub.f32 2.0, %v223
    %v225 = vmul.f32 %v222, %v224
    %v226 = vmul.f32 %v218, %v225
    %227 = vst [vmem:[#allocation8] sm:$0x3] %v226
    // Predicated region
    $region34: #{text_sentiment_forward.1} parent=1 // pred_check
      _
    $region35: #{text_sentiment_forward.1} parent=1 // pred_check_branch
      %229 = sbr.rel (0) target = $region37
    $region36: #{text_sentiment_forward.1} parent=1 // pred_region
      %231 = vsyncadd [#allocation4], 0
      %s233 = sshll.u32 [#allocation8], 4
      %s234 = int_to_ptr.vmem [resolvable:$true] %s233
      %s235 = sshll.u32 %s5, 4
      %s236 = int_to_ptr.hbm [resolvable:$true] %s235
      %238 = dma.vmem_to_hbm [thread:$0]  %s234, 32, %s236, [#allocation4]
    $region37: #{text_sentiment_forward.1} parent=1 // pred_fallthru
      _
    // Predicated region
    $region38: #{text_sentiment_forward.1} parent=1 // pred_check
      _
    $region39: #{text_sentiment_forward.1} parent=1 // pred_check_branch
      %240 = sbr.rel (0) target = $region41
    $region40: #{text_sentiment_forward.1} parent=1 // pred_region
      %242 = vsyncadd [#allocation10], 0
      %s244 = sshll.u32 [#allocation9], 4
      %s245 = int_to_ptr.vmem [resolvable:$true] %s244
      %s246 = sshll.u32 %s6, 4
      %s247 = int_to_ptr.hbm [resolvable:$true] %s246
      %249 = dma.vmem_to_hbm [thread:$0]  %s245, 32, %s247, [#allocation10]
    $region41: #{text_sentiment_forward.1} parent=1 // pred_fallthru
      _
    // Predicated region
    $region42: #{text_sentiment_forward.1} parent=1 // pred_check
      _
    $region43: #{text_sentiment_forward.1} parent=1 // pred_check_branch
      %251 = sbr.rel (0) target = $region45
    $region44: #{text_sentiment_forward.1} parent=1 // pred_region
      %253 = dma.done [#allocation4], 32
    $region45: #{text_sentiment_forward.1} parent=1 // pred_fallthru
      _
    // Predicated region
    $region46: #{text_sentiment_forward.1} parent=1 // pred_check
      _
    $region47: #{text_sentiment_forward.1} parent=1 // pred_check_branch
      %255 = sbr.rel (0) target = $region49
    $region48: #{text_sentiment_forward.1} parent=1 // pred_region
      %257 = dma.done [#allocation10], 32
    $region49: #{text_sentiment_forward.1} parent=1 // pred_fallthru
      _
    %258 = vsyncpa [#allocation3], 1
    %259 = vsyncpa [#allocation6], 1
    %260 = vsyncpa [#allocation4], 1
    %261 = vsyncpa [#allocation10], 1

</llo_original>
